<compile_context>
chip_gen: v7x
topology: tpu7x:2x2x1
jax: 0.10.0
libtpu: 0.0.40
codegen_flags: <defaults>
</compile_context>

<pallas_src>
import jax
import jax.numpy as jnp
from jax import lax
from jax.experimental import pallas as pl
from jax.experimental.pallas import tpu as pltpu

LANE = 128
SUBLANE = 8


def _round_up(x, m):
    return (x + m - 1) // m * m


def _make_residual_stack_kernel(seq_len, num_layers):
    def kernel(x_ref, w1_ref, w2_ref, o_ref):
        # x_ref : (Mp, Cp)                   flattened (B*L padded, C padded)
        # w1_ref: (num_layers, 3*Cp, Crhp)   k=3 conv weights, tap-major rows
        # w2_ref: (num_layers, Crhp, Cp)     k=1 conv weights
        # o_ref : (Mp, Cp)
        Mp, Cp = x_ref.shape
        x = x_ref[...]

        # Loop-invariant per-batch boundary masks (batch is flattened into rows).
        row_idx = lax.broadcasted_iota(jnp.int32, (Mp, Cp), 0)
        pos = row_idx % seq_len
        is_first = pos == 0
        is_last = pos == seq_len - 1

        # Small static layer count -> unrolled at trace time.
        for i in range(num_layers):
            h = jnp.maximum(x, 0.0)

            # Neighbours for the kernel-3 conv with zero padding=1.
            # pltpu.roll requires non-negative shifts: shift=Mp-1 == shift=-1.
            h_m1 = jnp.where(is_first, 0.0, pltpu.roll(h, shift=1, axis=0))       # x[l-1]
            h_p1 = jnp.where(is_last, 0.0, pltpu.roll(h, shift=Mp - 1, axis=0))   # x[l+1]

            # Single MXU contraction with K = 3*Cp (taps fused along lanes).
            lhs = jnp.concatenate([h_m1, h, h_p1], axis=1)                        # (Mp, 3*Cp)
            y = jnp.dot(lhs, w1_ref[i], preferred_element_type=jnp.float32)
            y = jnp.maximum(y, 0.0)

            t = jnp.dot(y, w2_ref[i], preferred_element_type=jnp.float32)
            x = x + t

        o_ref[...] = jnp.maximum(x, 0.0)

    return kernel


def residual_stack_pallas(x_ncl, w1, w2):
    """x_ncl: (B, C, L) float32.
    w1: (num_layers, Crh, C, 3)  -- PyTorch Conv1d weight layout (Cout, Cin, K).
    w2: (num_layers, C, Crh, 1)  -- PyTorch Conv1d weight layout.
    Returns (B, C, L)."""
    B, C, L = x_ncl.shape
    num_layers, Crh = w1.shape[0], w1.shape[1]

    Cp = _round_up(C, LANE)
    Crhp = _round_up(Crh, LANE)
    M = B * L
    Mp = _round_up(M, SUBLANE)

    # Activations: NCL -> NLC -> (B*L, C) -> pad to (Mp, Cp).
    x_flat = jnp.transpose(x_ncl, (0, 2, 1)).reshape(M, C)
    x_pad = jnp.pad(x_flat, ((0, Mp - M), (0, Cp - C)))

    # w1: (NL, Crh, C, 3) -> (NL, 3, C, Crh), pad channels, flatten taps into K.
    w1_t = jnp.transpose(w1, (0, 3, 2, 1))
    w1_p = jnp.pad(w1_t, ((0, 0), (0, 0), (0, Cp - C), (0, Crhp - Crh)))
    w1_flat = w1_p.reshape(num_layers, 3 * Cp, Crhp)

    # w2: (NL, C, Crh, 1) -> (NL, Crh, C), pad channels.
    w2_t = jnp.transpose(w2[..., 0], (0, 2, 1))
    w2_p = jnp.pad(w2_t, ((0, 0), (0, Crhp - Crh), (0, Cp - C)))

    kernel = _make_residual_stack_kernel(L, num_layers)

    out_pad = pl.pallas_call(
        kernel,
        out_shape=jax.ShapeDtypeStruct((Mp, Cp), x_pad.dtype),
        grid_spec=pltpu.PrefetchScalarGridSpec(
            num_scalar_prefetch=0,
            grid=(1,),
            in_specs=[
                pl.BlockSpec((Mp, Cp), lambda i: (0, 0)),
                pl.BlockSpec((num_layers, 3 * Cp, Crhp), lambda i: (0, 0, 0)),
                pl.BlockSpec((num_layers, Crhp, Cp), lambda i: (0, 0, 0)),
            ],
            out_specs=pl.BlockSpec((Mp, Cp), lambda i: (0, 0)),
        ),
        compiler_params=pltpu.CompilerParams(
            dimension_semantics=("arbitrary",)),
    )(x_pad, w1_flat, w2_p)

    # Unpad and restore NCL.
    out = out_pad[:M, :C].reshape(B, L, C)
    return jnp.transpose(out, (0, 2, 1))


def residual_stack_ref(x, w1, w2):
    """Pure-JAX reference matching the PyTorch ResidualStack forward (bias=False convs)."""
    for i in range(w1.shape[0]):
        h = jnp.maximum(x, 0.0)
        y = lax.conv_general_dilated(
            h, w1[i], window_strides=(1,), padding=[(1, 1)],
            dimension_numbers=('NCH', 'OIH', 'NCH'))
        y = jnp.maximum(y, 0.0)
        t = lax.conv_general_dilated(
            y, w2[i], window_strides=(1,), padding=[(0, 0)],
            dimension_numbers=('NCH', 'OIH', 'NCH'))
        x = x + t
    return jnp.maximum(x, 0.0)


if __name__ == "__main__":
    # Module hyper-params (in_channels must equal num_hiddens for the residual add).
    B, L = 2, 16
    in_channels = num_hiddens = 32
    num_residual_hiddens = 16
    num_residual_layers = 2

    key = jax.random.PRNGKey(0)
    kx, kw1, kw2 = jax.random.split(key, 3)

    x = jax.random.normal(kx, (B, in_channels, L), dtype=jnp.float32)
    # Deterministic synthetic weights (PyTorch Conv1d layout: (Cout, Cin, K), bias=False).
    w1 = 0.1 * jax.random.normal(
        kw1, (num_residual_layers, num_residual_hiddens, in_channels, 3), dtype=jnp.float32)
    w2 = 0.1 * jax.random.normal(
        kw2, (num_residual_layers, num_hiddens, num_residual_hiddens, 1), dtype=jnp.float32)

    out = residual_stack_pallas(x, w1, w2)
    out = jax.block_until_ready(out)

    ref = residual_stack_ref(x, w1, w2)
    assert out.shape == ref.shape == (B, num_hiddens, L)
    assert jnp.allclose(out, ref, atol=1e-5, rtol=1e-5), "mismatch vs reference"

    print("KERNEL_OK")
</pallas_src>

<mosaic_0001>
module attributes {stable_mosaic.version = 11 : i64} {
  func.func @kernel(%arg0: i32, %arg1: memref<32x128xf32, #tpu.memory_space<vmem>>, %arg2: memref<2x384x128xf32, #tpu.memory_space<vmem>>, %arg3: memref<2x128x128xf32, #tpu.memory_space<vmem>>, %arg4: memref<32x128xf32, #tpu.memory_space<vmem>>) attributes {dimension_semantics = [#tpu.dimension_semantics<arbitrary>], iteration_bounds = array<i64: 1>, scalar_prefetch = 0 : i64, scratch_operands = 0 : i64, tpu.core_type = #tpu.core_type<tc>, window_params = [{pipeline_mode = #tpu.pipeline_mode<synchronous>, transform_indices = @transform_0, window_bounds = array<i64: 32, 128>}, {pipeline_mode = #tpu.pipeline_mode<synchronous>, transform_indices = @transform_1, window_bounds = array<i64: 2, 384, 128>}, {pipeline_mode = #tpu.pipeline_mode<synchronous>, transform_indices = @transform_2, window_bounds = array<i64: 2, 128, 128>}, {pipeline_mode = #tpu.pipeline_mode<synchronous>, transform_indices = @transform_3, window_bounds = array<i64: 32, 128>}]} {
    %c0 = arith.constant 0 : index
    %c0_0 = arith.constant 0 : index
    %0 = vector.load %arg1[%c0, %c0_0] : memref<32x128xf32, #tpu.memory_space<vmem>>, vector<32x128xf32>
    %1 = tpu.iota {dimensions = array<i32: 0>} : vector<32x128xi32>
    %c16_i32 = arith.constant 16 : i32
    %c0_i32 = arith.constant 0 : i32
    %2 = arith.cmpi eq, %c16_i32, %c0_i32 : i32
    %c1_i32 = arith.constant 1 : i32
    %3 = arith.select %2, %c1_i32, %c16_i32 : i32
    %4 = vector.broadcast %3 : i32 to vector<32x128xi32>
    %5 = arith.remsi %1, %4 : vector<32x128xi32>
    %c0_i32_1 = arith.constant 0 : i32
    %6 = vector.broadcast %c0_i32_1 : i32 to vector<32x128xi32>
    %7 = arith.cmpi ne, %5, %6 : vector<32x128xi32>
    %c0_i32_2 = arith.constant 0 : i32
    %8 = vector.broadcast %c0_i32_2 : i32 to vector<32x128xi32>
    %9 = arith.cmpi slt, %5, %8 : vector<32x128xi32>
    %c0_i32_3 = arith.constant 0 : i32
    %10 = arith.cmpi slt, %3, %c0_i32_3 : i32
    %11 = vector.broadcast %10 : i1 to vector<32x128xi1>
    %12 = vector.broadcast %11 : vector<32x128xi1> to vector<32x128xi1>
    %13 = arith.xori %9, %12 : vector<32x128xi1>
    %14 = arith.andi %13, %7 : vector<32x128xi1>
    %15 = vector.broadcast %3 : i32 to vector<32x128xi32>
    %16 = arith.addi %5, %15 : vector<32x128xi32>
    %17 = arith.select %14, %16, %5 : vector<32x128xi1>, vector<32x128xi32>
    %c0_i32_4 = arith.constant 0 : i32
    %18 = vector.broadcast %c0_i32_4 : i32 to vector<32x128xi32>
    %19 = arith.cmpi eq, %17, %18 : vector<32x128xi32>
    %c15_i32 = arith.constant 15 : i32
    %20 = vector.broadcast %c15_i32 : i32 to vector<32x128xi32>
    %21 = arith.cmpi eq, %17, %20 : vector<32x128xi32>
    %cst = arith.constant 0.000000e+00 : f32
    %22 = vector.broadcast %cst : f32 to vector<32x128xf32>
    %23 = arith.maximumf %0, %22 : vector<32x128xf32>
    %c1_i32_5 = arith.constant 1 : i32
    %24 = tpu.dynamic_rotate %23 by %c1_i32_5 dim 0 : vector<32x128xf32>, i32 -> vector<32x128xf32>
    %cst_6 = arith.constant 0.000000e+00 : f32
    %25 = vector.broadcast %cst_6 : f32 to vector<32x128xf32>
    %26 = arith.select %19, %25, %24 : vector<32x128xi1>, vector<32x128xf32>
    %c31_i32 = arith.constant 31 : i32
    %27 = tpu.dynamic_rotate %23 by %c31_i32 dim 0 : vector<32x128xf32>, i32 -> vector<32x128xf32>
    %cst_7 = arith.constant 0.000000e+00 : f32
    %28 = vector.broadcast %cst_7 : f32 to vector<32x128xf32>
    %29 = arith.select %21, %28, %27 : vector<32x128xi1>, vector<32x128xf32>
    %30 = tpu.concatenate %26, %23, %29 in 1 : vector<32x128xf32>, vector<32x128xf32>, vector<32x128xf32> -> vector<32x384xf32>
    %c0_8 = arith.constant 0 : index
    %c0_9 = arith.constant 0 : index
    %c0_10 = arith.constant 0 : index
    %31 = vector.load %arg2[%c0_8, %c0_9, %c0_10] : memref<2x384x128xf32, #tpu.memory_space<vmem>>, vector<1x384x128xf32>
    %32 = vector.shape_cast %31 : vector<1x384x128xf32> to vector<384x128xf32>
    %cst_11 = arith.constant dense<0.000000e+00> : vector<32x128xf32>
    %33 = tpu.matmul %30, %32, %cst_11 {dimension_numbers = #tpu.dot_dimension_numbers<[1], [0], [0], [1], [0, 0, 1, 1], [], []>} : vector<32x384xf32>, vector<384x128xf32>, vector<32x128xf32> -> vector<32x128xf32>
    %cst_12 = arith.constant 0.000000e+00 : f32
    %34 = vector.broadcast %cst_12 : f32 to vector<32x128xf32>
    %35 = arith.maximumf %33, %34 : vector<32x128xf32>
    %c0_13 = arith.constant 0 : index
    %c0_14 = arith.constant 0 : index
    %c0_15 = arith.constant 0 : index
    %36 = vector.load %arg3[%c0_13, %c0_14, %c0_15] : memref<2x128x128xf32, #tpu.memory_space<vmem>>, vector<1x128x128xf32>
    %37 = vector.shape_cast %36 : vector<1x128x128xf32> to vector<128x128xf32>
    %cst_16 = arith.constant dense<0.000000e+00> : vector<32x128xf32>
    %38 = tpu.matmul %35, %37, %cst_16 {dimension_numbers = #tpu.dot_dimension_numbers<[1], [0], [0], [1], [0, 0, 1, 1], [], []>} : vector<32x128xf32>, vector<128x128xf32>, vector<32x128xf32> -> vector<32x128xf32>
    %39 = arith.addf %0, %38 : vector<32x128xf32>
    %cst_17 = arith.constant 0.000000e+00 : f32
    %40 = vector.broadcast %cst_17 : f32 to vector<32x128xf32>
    %41 = arith.maximumf %39, %40 : vector<32x128xf32>
    %c1_i32_18 = arith.constant 1 : i32
    %42 = tpu.dynamic_rotate %41 by %c1_i32_18 dim 0 : vector<32x128xf32>, i32 -> vector<32x128xf32>
    %cst_19 = arith.constant 0.000000e+00 : f32
    %43 = vector.broadcast %cst_19 : f32 to vector<32x128xf32>
    %44 = arith.select %19, %43, %42 : vector<32x128xi1>, vector<32x128xf32>
    %c31_i32_20 = arith.constant 31 : i32
    %45 = tpu.dynamic_rotate %41 by %c31_i32_20 dim 0 : vector<32x128xf32>, i32 -> vector<32x128xf32>
    %cst_21 = arith.constant 0.000000e+00 : f32
    %46 = vector.broadcast %cst_21 : f32 to vector<32x128xf32>
    %47 = arith.select %21, %46, %45 : vector<32x128xi1>, vector<32x128xf32>
    %48 = tpu.concatenate %44, %41, %47 in 1 : vector<32x128xf32>, vector<32x128xf32>, vector<32x128xf32> -> vector<32x384xf32>
    %c1 = arith.constant 1 : index
    %c0_22 = arith.constant 0 : index
    %c0_23 = arith.constant 0 : index
    %49 = vector.load %arg2[%c1, %c0_22, %c0_23] : memref<2x384x128xf32, #tpu.memory_space<vmem>>, vector<1x384x128xf32>
    %50 = vector.shape_cast %49 : vector<1x384x128xf32> to vector<384x128xf32>
    %cst_24 = arith.constant dense<0.000000e+00> : vector<32x128xf32>
    %51 = tpu.matmul %48, %50, %cst_24 {dimension_numbers = #tpu.dot_dimension_numbers<[1], [0], [0], [1], [0, 0, 1, 1], [], []>} : vector<32x384xf32>, vector<384x128xf32>, vector<32x128xf32> -> vector<32x128xf32>
    %cst_25 = arith.constant 0.000000e+00 : f32
    %52 = vector.broadcast %cst_25 : f32 to vector<32x128xf32>
    %53 = arith.maximumf %51, %52 : vector<32x128xf32>
    %c1_26 = arith.constant 1 : index
    %c0_27 = arith.constant 0 : index
    %c0_28 = arith.constant 0 : index
    %54 = vector.load %arg3[%c1_26, %c0_27, %c0_28] : memref<2x128x128xf32, #tpu.memory_space<vmem>>, vector<1x128x128xf32>
    %55 = vector.shape_cast %54 : vector<1x128x128xf32> to vector<128x128xf32>
    %cst_29 = arith.constant dense<0.000000e+00> : vector<32x128xf32>
    %56 = tpu.matmul %53, %55, %cst_29 {dimension_numbers = #tpu.dot_dimension_numbers<[1], [0], [0], [1], [0, 0, 1, 1], [], []>} : vector<32x128xf32>, vector<128x128xf32>, vector<32x128xf32> -> vector<32x128xf32>
    %57 = arith.addf %39, %56 : vector<32x128xf32>
    %cst_30 = arith.constant 0.000000e+00 : f32
    %58 = vector.broadcast %cst_30 : f32 to vector<32x128xf32>
    %59 = arith.maximumf %57, %58 : vector<32x128xf32>
    %c0_31 = arith.constant 0 : index
    %c0_32 = arith.constant 0 : index
    %60 = vector.load %arg4[%c0_31, %c0_32] : memref<32x128xf32, #tpu.memory_space<vmem>>, vector<32x128xf32>
    tpu.vector_store %arg4[%c0_31, %c0_32], %59 {strides = array<i32>} : memref<32x128xf32, #tpu.memory_space<vmem>>, vector<32x128xf32>,
    return
  }
  func.func @transform_0(%arg0: i32) -> (i32, i32) {
    %c0_i32 = arith.constant 0 : i32
    %c0_i32_0 = arith.constant 0 : i32
    %c0_i32_1 = arith.constant 0 : i32
    return %c0_i32, %c0_i32_0 : i32, i32
  }
  func.func @transform_1(%arg0: i32) -> (i32, i32, i32) {
    %c0_i32 = arith.constant 0 : i32
    %c0_i32_0 = arith.constant 0 : i32
    %c0_i32_1 = arith.constant 0 : i32
    %c0_i32_2 = arith.constant 0 : i32
    return %c0_i32, %c0_i32_0, %c0_i32_1 : i32, i32, i32
  }
  func.func @transform_2(%arg0: i32) -> (i32, i32, i32) {
    %c0_i32 = arith.constant 0 : i32
    %c0_i32_0 = arith.constant 0 : i32
    %c0_i32_1 = arith.constant 0 : i32
    %c0_i32_2 = arith.constant 0 : i32
    return %c0_i32, %c0_i32_0, %c0_i32_1 : i32, i32, i32
  }
  func.func @transform_3(%arg0: i32) -> (i32, i32) {
    %c0_i32 = arith.constant 0 : i32
    %c0_i32_0 = arith.constant 0 : i32
    %c0_i32_1 = arith.constant 0 : i32
    return %c0_i32, %c0_i32_0 : i32, i32
  }
}

</mosaic_0001>

<llo_original>
// kernel: tpu_custom_call.1
$region0: #{tpu_custom_call.1}
  #allocation0 [shape = 'u32[]', space=smem, size = 0x4, offset = 0x4, fixed_abs, tag = 'smem constant byte address 0x4 - core index']
  #allocation1 [shape = 'u32[144,128]{1,0:T(1,128)}', space=vmem, size = 0x12000, scoped, tag = 'internal scratch']
  %s0 = inlined_call_operand.hbm [shape: f32[32,128], index: 0, kind: input, shape index: {}]
  %s1 = inlined_call_operand.hbm [shape: f32[2,384,128], index: 1, kind: input, shape index: {}]
  %s2 = inlined_call_operand.hbm [shape: f32[2,128,128], index: 2, kind: input, shape index: {}]
  %s3 = inlined_call_operand.hbm [shape: f32[32,128], index: 3, kind: output, shape index: {}]
  %s4 = sld [smem:[#allocation0]]
  $region34: #{tpu_custom_call.1} parent=0
    _
  %s6 = ssub.s32 1, %s4
  %s7 = scalar_select 0, %s6, %s4
  $region1: #{tpu_custom_call.1} parent=0
    #allocation2 [shape = 'u8[16384]{0}', space=vmem, size = 0x4000, scoped, tag = 'input window, operand 0, single buffered']
    #allocation3 [shape = 's32[1]{0}', space=sflag, size = 0x4, scoped, tag = 'scoped memory for tpu_custom_call.1']
    #allocation4 [shape = 's32[1]{0}', space=sflag, size = 0x4, scoped, tag = 'scoped memory for tpu_custom_call.1']
    #allocation5 [shape = 'u8[393216]{0}', space=vmem, size = 0x60000, scoped, tag = 'input window, operand 1, single buffered']
    #allocation6 [shape = 's32[1]{0}', space=sflag, size = 0x4, scoped, tag = 'scoped memory for tpu_custom_call.1']
    #allocation7 [shape = 'u8[131072]{0}', space=vmem, size = 0x20000, scoped, tag = 'input window, operand 2, single buffered']
    #allocation8 [shape = 'u8[16384]{0}', space=vmem, size = 0x4000, scoped, tag = 'output window, operand 0, single buffered']
    %8 = vsyncpa [#allocation3], 0
    %9 = vsyncpa [#allocation6], 0
    %10 = vsyncpa [#allocation4], 0
    // Predicated region
    $region2: #{tpu_custom_call.1} parent=1 // pred_check
      _
    $region3: #{tpu_custom_call.1} parent=1 // pred_check_branch
      %12 = sbr.rel (0) target = $region5
    $region4: #{tpu_custom_call.1} parent=1 // pred_region
      %s14 = ssub.s32 512, 512
      %15 = vsyncadd [#allocation3], %s14
      %s16 = sshll.u32 [#allocation2], 4
      %s17 = int_to_ptr.vmem [resolvable:$true] %s16
      %22 = dma.hbm_to_vmem [thread:$0]  %s0, 512, %s17, [#allocation3], 128, 128, 8
    $region5: #{tpu_custom_call.1} parent=1 // pred_fallthru
      _
    // Predicated region
    $region6: #{tpu_custom_call.1} parent=1 // pred_check
      _
    $region7: #{tpu_custom_call.1} parent=1 // pred_check_branch
      %24 = sbr.rel (0) target = $region9
    $region8: #{tpu_custom_call.1} parent=1 // pred_region
      %s26 = ssub.s32 12288, 12288
      %27 = vsyncadd [#allocation6], %s26
      %s28 = sshll.u32 [#allocation5], 4
      %s29 = int_to_ptr.vmem [resolvable:$true] %s28
      %34 = dma.hbm_to_vmem [thread:$0]  %s1, 12288, %s29, [#allocation6], 128, 128, 8
    $region9: #{tpu_custom_call.1} parent=1 // pred_fallthru
      _
    // Predicated region
    $region10: #{tpu_custom_call.1} parent=1 // pred_check
      _
    $region11: #{tpu_custom_call.1} parent=1 // pred_check_branch
      %36 = sbr.rel (0) target = $region13
    $region12: #{tpu_custom_call.1} parent=1 // pred_region
      %s38 = ssub.s32 4096, 4096
      %39 = vsyncadd [#allocation6], %s38
      %s40 = sshll.u32 [#allocation7], 4
      %s41 = int_to_ptr.vmem [resolvable:$true] %s40
      %46 = dma.hbm_to_vmem [thread:$0]  %s2, 4096, %s41, [#allocation6], 128, 128, 8
    $region13: #{tpu_custom_call.1} parent=1 // pred_fallthru
      _
    // Predicated region
    $region14: #{tpu_custom_call.1} parent=1 // pred_check
      _
    $region15: #{tpu_custom_call.1} parent=1 // pred_check_branch
      %48 = sbr.rel (0) target = $region17
    $region16: #{tpu_custom_call.1} parent=1 // pred_region
      %49 = dma.done [#allocation3], 512
    $region17: #{tpu_custom_call.1} parent=1 // pred_fallthru
      _
    // Predicated region
    $region18: #{tpu_custom_call.1} parent=1 // pred_check
      _
    $region19: #{tpu_custom_call.1} parent=1 // pred_check_branch
      %51 = sbr.rel (0) target = $region21
    $region20: #{tpu_custom_call.1} parent=1 // pred_region
      %52 = dma.done [#allocation6], 12288
    $region21: #{tpu_custom_call.1} parent=1 // pred_fallthru
      _
    // Predicated region
    $region22: #{tpu_custom_call.1} parent=1 // pred_check
      _
    $region23: #{tpu_custom_call.1} parent=1 // pred_check_branch
      %54 = sbr.rel (0) target = $region25
    $region24: #{tpu_custom_call.1} parent=1 // pred_region
      %55 = dma.done [#allocation6], 4096
    $region25: #{tpu_custom_call.1} parent=1 // pred_fallthru
      _
    %v56 = vld [vmem:[#allocation2] sm:$0xff]
    %v57 = vld [vmem:[#allocation2 + $0x8] sm:$0xff]
    %v58 = vld [vmem:[#allocation2 + $0x10] sm:$0xff]
    %v59 = vld [vmem:[#allocation2 + $0x18] sm:$0xff]
    %v60 = vlaneseq
    %v61 = vshrl.u32 %v60, 7
    %v62 = vadd.s32 %v61, 8
    %v63 = vadd.s32 %v61, 16
    %v64 = vadd.s32 %v61, 24
    %vm65 = vcmp.lt.s32.totalorder %v61, 0
    %v66 = vsub.s32 0, %v61
    %v67 = vsel %vm65, %v66, %v61
    %v68 = vshrl.u32 %v67, 4
    %v69 = vand.u32 %v67, 15
    %v70 = vsub.s32 0, %v69
    %v71 = vsel %vm65, %v70, %v69
    %vm72 = vcmp.lt.s32.totalorder %v62, 0
    %v73 = vsub.s32 0, %v62
    %v74 = vsel %vm72, %v73, %v62
    %v75 = vshrl.u32 %v74, 4
    %v76 = vand.u32 %v74, 15
    %v77 = vsub.s32 0, %v76
    %v78 = vsel %vm72, %v77, %v76
    %vm79 = vcmp.lt.s32.totalorder %v63, 0
    %v80 = vsub.s32 0, %v63
    %v81 = vsel %vm79, %v80, %v63
    %v82 = vshrl.u32 %v81, 4
    %v83 = vand.u32 %v81, 15
    %v84 = vsub.s32 0, %v83
    %v85 = vsel %vm79, %v84, %v83
    %vm86 = vcmp.lt.s32.totalorder %v64, 0
    %v87 = vsub.s32 0, %v64
    %v88 = vsel %vm86, %v87, %v64
    %v89 = vshrl.u32 %v88, 4
    %v90 = vand.u32 %v88, 15
    %v91 = vsub.s32 0, %v90
    %v92 = vsel %vm86, %v91, %v90
    %vm93 = vcmp.ne.s32.totalorder %v71, 0
    %vm94 = vcmp.ne.s32.totalorder %v78, 0
    %vm95 = vcmp.ne.s32.totalorder %v85, 0
    %vm96 = vcmp.ne.s32.totalorder %v92, 0
    %vm97 = vcmp.lt.s32.totalorder %v71, 0
    %vm98 = vcmp.lt.s32.totalorder %v78, 0
    %vm99 = vcmp.lt.s32.totalorder %v85, 0
    %vm100 = vcmp.lt.s32.totalorder %v92, 0
    %vm101 = vmand %vm97, %vm93
    %vm102 = vmand %vm98, %vm94
    %vm103 = vmand %vm99, %vm95
    %vm104 = vmand %vm100, %vm96
    %v105 = vadd.s32 %v71, 16
    %v106 = vadd.s32 %v78, 16
    %v107 = vadd.s32 %v85, 16
    %v108 = vadd.s32 %v92, 16
    %v109 = vsel %vm101, %v105, %v71
    %v110 = vsel %vm102, %v106, %v78
    %v111 = vsel %vm103, %v107, %v85
    %v112 = vsel %vm104, %v108, %v92
    %vm113 = vcmp.eq.s32.totalorder %v109, 0
    %vm114 = vcmp.eq.s32.totalorder %v110, 0
    %vm115 = vcmp.eq.s32.totalorder %v111, 0
    %vm116 = vcmp.eq.s32.totalorder %v112, 0
    %vm117 = vcmp.eq.s32.totalorder %v109, 15
    %vm118 = vcmp.eq.s32.totalorder %v110, 15
    %vm119 = vcmp.eq.s32.totalorder %v111, 15
    %vm120 = vcmp.eq.s32.totalorder %v112, 15
    %v121 = vmax.f32 %v56, 0.0
    %v122 = vmax.f32 %v57, 0.0
    %v123 = vmax.f32 %v58, 0.0
    %v124 = vmax.f32 %v59, 0.0
    %v125 = vrot.slane %v121, 7
    %v126 = vrot.slane %v122, 7
    %v127 = vrot.slane %v123, 7
    %v128 = vrot.slane %v124, 7
    %vm129 = vcmp.lt.s32.totalorder %v61, 1
    %v130 = vsel %vm129, %v127, %v128
    %v131 = vsel %vm129, %v126, %v127
    %v132 = vsel %vm129, %v125, %v126
    %v133 = vsel %vm129, %v128, %v125
    %v134 = vsel %vm113, 0.0, %v133
    %v135 = vsel %vm114, 0.0, %v132
    %v136 = vsel %vm115, 0.0, %v131
    %v137 = vsel %vm116, 0.0, %v130
    %v138 = vrot.slane %v121, 1
    %v139 = vrot.slane %v122, 1
    %v140 = vrot.slane %v123, 1
    %v141 = vrot.slane %v124, 1
    %vm142 = vcmp.lt.s32.totalorder %v61, 7
    %v143 = vsel %vm142, %v140, %v141
    %v144 = vsel %vm142, %v139, %v140
    %v145 = vsel %vm142, %v138, %v139
    %v146 = vsel %vm142, %v141, %v138
    %v147 = vsel %vm117, 0.0, %v145
    %v148 = vsel %vm118, 0.0, %v144
    %v149 = vsel %vm119, 0.0, %v143
    %v150 = vsel %vm120, 0.0, %v146
    %v151 = vld [vmem:[#allocation5] sm:$0xff]
    %v152 = vld [vmem:[#allocation5 + $0x8] sm:$0xff]
    %v153 = vld [vmem:[#allocation5 + $0x10] sm:$0xff]
    %v154 = vld [vmem:[#allocation5 + $0x18] sm:$0xff]
    %v155 = vld [vmem:[#allocation5 + $0x20] sm:$0xff]
    %v156 = vld [vmem:[#allocation5 + $0x28] sm:$0xff]
    %v157 = vld [vmem:[#allocation5 + $0x30] sm:$0xff]
    %v158 = vld [vmem:[#allocation5 + $0x38] sm:$0xff]
    %v159 = vld [vmem:[#allocation5 + $0x40] sm:$0xff]
    %v160 = vld [vmem:[#allocation5 + $0x48] sm:$0xff]
    %v161 = vld [vmem:[#allocation5 + $0x50] sm:$0xff]
    %v162 = vld [vmem:[#allocation5 + $0x58] sm:$0xff]
    %v163 = vld [vmem:[#allocation5 + $0x60] sm:$0xff]
    %v164 = vld [vmem:[#allocation5 + $0x68] sm:$0xff]
    %v165 = vld [vmem:[#allocation5 + $0x70] sm:$0xff]
    %v166 = vld [vmem:[#allocation5 + $0x78] sm:$0xff]
    %v167 = vld [vmem:[#allocation5 + $0x80] sm:$0xff]
    %v168 = vld [vmem:[#allocation5 + $0x88] sm:$0xff]
    %v169 = vld [vmem:[#allocation5 + $0x90] sm:$0xff]
    %v170 = vld [vmem:[#allocation5 + $0x98] sm:$0xff]
    %v171 = vld [vmem:[#allocation5 + $0xa0] sm:$0xff]
    %v172 = vld [vmem:[#allocation5 + $0xa8] sm:$0xff]
    %v173 = vld [vmem:[#allocation5 + $0xb0] sm:$0xff]
    %v174 = vld [vmem:[#allocation5 + $0xb8] sm:$0xff]
    %v175 = vld [vmem:[#allocation5 + $0xc0] sm:$0xff]
    %v176 = vld [vmem:[#allocation5 + $0xc8] sm:$0xff]
    %v177 = vld [vmem:[#allocation5 + $0xd0] sm:$0xff]
    %v178 = vld [vmem:[#allocation5 + $0xd8] sm:$0xff]
    %v179 = vld [vmem:[#allocation5 + $0xe0] sm:$0xff]
    %v180 = vld [vmem:[#allocation5 + $0xe8] sm:$0xff]
    %v181 = vld [vmem:[#allocation5 + $0xf0] sm:$0xff]
    %v182 = vld [vmem:[#allocation5 + $0xf8] sm:$0xff]
    %v183 = vld [vmem:[#allocation5 + $0x100] sm:$0xff]
    %v184 = vld [vmem:[#allocation5 + $0x108] sm:$0xff]
    %v185 = vld [vmem:[#allocation5 + $0x110] sm:$0xff]
    %v186 = vld [vmem:[#allocation5 + $0x118] sm:$0xff]
    %v187 = vld [vmem:[#allocation5 + $0x120] sm:$0xff]
    %v188 = vld [vmem:[#allocation5 + $0x128] sm:$0xff]
    %v189 = vld [vmem:[#allocation5 + $0x130] sm:$0xff]
    %v190 = vld [vmem:[#allocation5 + $0x138] sm:$0xff]
    %v191 = vld [vmem:[#allocation5 + $0x140] sm:$0xff]
    %v192 = vld [vmem:[#allocation5 + $0x148] sm:$0xff]
    %v193 = vld [vmem:[#allocation5 + $0x150] sm:$0xff]
    %v194 = vld [vmem:[#allocation5 + $0x158] sm:$0xff]
    %v195 = vld [vmem:[#allocation5 + $0x160] sm:$0xff]
    %v196 = vld [vmem:[#allocation5 + $0x168] sm:$0xff]
    %v197 = vld [vmem:[#allocation5 + $0x170] sm:$0xff]
    %v198 = vld [vmem:[#allocation5 + $0x178] sm:$0xff]
    %199 = vmatprep.subr.mxu0 0.0
    %200 = vmatpush1.msra.mxu0 %v151
    %201 = vmatprep.subr.mxu0 0.0
    %202 = vmatpush1.msra.mxu0 %v152
    %203 = vmatprep.subr.mxu0 0.0
    %204 = vmatpush1.msra.mxu0 %v153
    %205 = vmatprep.subr.mxu0 0.0
    %206 = vmatpush1.msra.mxu0 %v154
    %207 = vmatprep.subr.mxu0 0.0
    %208 = vmatpush1.msra.mxu0 %v155
    %209 = vmatprep.subr.mxu0 0.0
    %210 = vmatpush1.msra.mxu0 %v156
    %211 = vmatprep.subr.mxu0 0.0
    %212 = vmatpush1.msra.mxu0 %v157
    %213 = vmatprep.subr.mxu0 0.0
    %214 = vmatpush1.msra.mxu0 %v158
    %215 = vmatprep.subr.mxu0 0.0
    %216 = vmatpush1.msra.mxu0 %v159
    %217 = vmatprep.subr.mxu0 0.0
    %218 = vmatpush1.msra.mxu0 %v160
    %219 = vmatprep.subr.mxu0 0.0
    %220 = vmatpush1.msra.mxu0 %v161
    %221 = vmatprep.subr.mxu0 0.0
    %222 = vmatpush1.msra.mxu0 %v162
    %223 = vmatprep.subr.mxu0 0.0
    %224 = vmatpush1.msra.mxu0 %v163
    %225 = vmatprep.subr.mxu0 0.0
    %226 = vmatpush1.msra.mxu0 %v164
    %227 = vmatprep.subr.mxu0 0.0
    %228 = vmatpush1.msra.mxu0 %v165
    %229 = vmatprep.subr.mxu0 0.0
    %230 = vmatpush1.msra.mxu0 %v166
    %231 = vmatprep.subr.mxu0 0.0
    %232 = vmatpush1.msra.mxu0 %v167
    %233 = vmatprep.subr.mxu0 0.0
    %234 = vmatpush1.msra.mxu0 %v168
    %235 = vmatprep.subr.mxu0 0.0
    %236 = vmatpush1.msra.mxu0 %v169
    %237 = vmatprep.subr.mxu0 0.0
    %238 = vmatpush1.msra.mxu0 %v170
    %239 = vmatprep.subr.mxu0 0.0
    %240 = vmatpush1.msra.mxu0 %v171
    %241 = vmatprep.subr.mxu0 0.0
    %242 = vmatpush1.msra.mxu0 %v172
    %243 = vmatprep.subr.mxu0 0.0
    %244 = vmatpush1.msra.mxu0 %v173
    %245 = vmatprep.subr.mxu0 0.0
    %246 = vmatpush1.msra.mxu0 %v174
    %247 = vmatprep.subr.mxu0 0.0
    %248 = vmatpush1.msra.mxu0 %v175
    %249 = vmatprep.subr.mxu0 0.0
    %250 = vmatpush1.msra.mxu0 %v176
    %251 = vmatprep.subr.mxu0 0.0
    %252 = vmatpush1.msra.mxu0 %v177
    %253 = vmatprep.subr.mxu0 0.0
    %254 = vmatpush1.msra.mxu0 %v178
    %255 = vmatprep.subr.mxu0 0.0
    %256 = vmatpush1.msra.mxu0 %v179
    %257 = vmatprep.subr.mxu0 0.0
    %258 = vmatpush1.msra.mxu0 %v180
    %259 = vmatprep.subr.mxu0 0.0
    %260 = vmatpush1.msra.mxu0 %v181
    %261 = vmatprep.subr.mxu0 0.0
    %262 = vmatpush1.msra.mxu0 %v182
    %263 = vmatprep.mubr.f32.mxu0 %v121
    %264 = vmatmul.mubr.f32.gmra.mrb[0].mxu0 %v134
    %v265 = vpop.f32.mrb[0].mxu0
    %v266 = vadd.f32 0.0, %v265
    %v267 = vpop.f32.mrb[0].mxu0
    %268 = vmatprep.mubr.f32.mxu0 %v122
    %269 = vmatmul.mubr.f32.gmra.mrb[0].mxu0 %v135
    %v270 = vpop.f32.mrb[0].mxu0
    %v271 = vadd.f32 0.0, %v270
    %v272 = vpop.f32.mrb[0].mxu0
    %273 = vmatprep.mubr.f32.mxu0 %v123
    %274 = vmatmul.mubr.f32.gmra.mrb[0].mxu0 %v136
    %v275 = vpop.f32.mrb[0].mxu0
    %v276 = vadd.f32 0.0, %v275
    %v277 = vpop.f32.mrb[0].mxu0
    %278 = vmatprep.mubr.f32.mxu0 %v124
    %279 = vmatmul.mubr.f32.gmra.mrb[0].mxu0 %v137
    %v280 = vpop.f32.mrb[0].mxu0
    %v281 = vadd.f32 0.0, %v280
    %v282 = vpop.f32.mrb[0].mxu0
    %283 = vdwg.mxu0
    %284 = vmatprep.subr.mxu0 0.0
    %285 = vmatpush1.msra.mxu0 %v183
    %286 = vmatprep.subr.mxu0 0.0
    %287 = vmatpush1.msra.mxu0 %v184
    %288 = vmatprep.subr.mxu0 0.0
    %289 = vmatpush1.msra.mxu0 %v185
    %290 = vmatprep.subr.mxu0 0.0
    %291 = vmatpush1.msra.mxu0 %v186
    %292 = vmatprep.subr.mxu0 0.0
    %293 = vmatpush1.msra.mxu0 %v187
    %294 = vmatprep.subr.mxu0 0.0
    %295 = vmatpush1.msra.mxu0 %v188
    %296 = vmatprep.subr.mxu0 0.0
    %297 = vmatpush1.msra.mxu0 %v189
    %298 = vmatprep.subr.mxu0 0.0
    %299 = vmatpush1.msra.mxu0 %v190
    %300 = vmatprep.subr.mxu0 0.0
    %301 = vmatpush1.msra.mxu0 %v191
    %302 = vmatprep.subr.mxu0 0.0
    %303 = vmatpush1.msra.mxu0 %v192
    %304 = vmatprep.subr.mxu0 0.0
    %305 = vmatpush1.msra.mxu0 %v193
    %306 = vmatprep.subr.mxu0 0.0
    %307 = vmatpush1.msra.mxu0 %v194
    %308 = vmatprep.subr.mxu0 0.0
    %309 = vmatpush1.msra.mxu0 %v195
    %310 = vmatprep.subr.mxu0 0.0
    %311 = vmatpush1.msra.mxu0 %v196
    %312 = vmatprep.subr.mxu0 0.0
    %313 = vmatpush1.msra.mxu0 %v197
    %314 = vmatprep.subr.mxu0 0.0
    %315 = vmatpush1.msra.mxu0 %v198
    %316 = vmatprep.subr.mxu0 0.0
    %317 = vmatpush1.msra.mxu0 0.0
    %318 = vmatprep.subr.mxu0 0.0
    %319 = vmatpush1.msra.mxu0 0.0
    %320 = vmatprep.subr.mxu0 0.0
    %321 = vmatpush1.msra.mxu0 0.0
    %322 = vmatprep.subr.mxu0 0.0
    %323 = vmatpush1.msra.mxu0 0.0
    %324 = vmatprep.subr.mxu0 0.0
    %325 = vmatpush1.msra.mxu0 0.0
    %326 = vmatprep.subr.mxu0 0.0
    %327 = vmatpush1.msra.mxu0 0.0
    %328 = vmatprep.subr.mxu0 0.0
    %329 = vmatpush1.msra.mxu0 0.0
    %330 = vmatprep.subr.mxu0 0.0
    %331 = vmatpush1.msra.mxu0 0.0
    %332 = vmatprep.subr.mxu0 0.0
    %333 = vmatpush1.msra.mxu0 0.0
    %334 = vmatprep.subr.mxu0 0.0
    %335 = vmatpush1.msra.mxu0 0.0
    %336 = vmatprep.subr.mxu0 0.0
    %337 = vmatpush1.msra.mxu0 0.0
    %338 = vmatprep.subr.mxu0 0.0
    %339 = vmatpush1.msra.mxu0 0.0
    %340 = vmatprep.subr.mxu0 0.0
    %341 = vmatpush1.msra.mxu0 0.0
    %342 = vmatprep.subr.mxu0 0.0
    %343 = vmatpush1.msra.mxu0 0.0
    %344 = vmatprep.subr.mxu0 0.0
    %345 = vmatpush1.msra.mxu0 0.0
    %346 = vmatprep.subr.mxu0 0.0
    %347 = vmatpush1.msra.mxu0 0.0
    %348 = vmatprep.mubr.f32.mxu0 0.0
    %349 = vmatmul.mubr.f32.gmra.mrb[0].mxu0 %v147
    %v350 = vpop.f32.mrb[0].mxu0
    %v351 = vadd.f32 %v266, %v350
    %v352 = vpop.f32.mrb[0].mxu0
    %353 = vmatprep.mubr.f32.mxu0 0.0
    %354 = vmatmul.mubr.f32.gmra.mrb[0].mxu0 %v148
    %v355 = vpop.f32.mrb[0].mxu0
    %v356 = vadd.f32 %v271, %v355
    %v357 = vpop.f32.mrb[0].mxu0
    %358 = vmatprep.mubr.f32.mxu0 0.0
    %359 = vmatmul.mubr.f32.gmra.mrb[0].mxu0 %v149
    %v360 = vpop.f32.mrb[0].mxu0
    %v361 = vadd.f32 %v276, %v360
    %v362 = vpop.f32.mrb[0].mxu0
    %363 = vmatprep.mubr.f32.mxu0 0.0
    %364 = vmatmul.mubr.f32.gmra.mrb[0].mxu0 %v150
    %v365 = vpop.f32.mrb[0].mxu0
    %v366 = vadd.f32 %v281, %v365
    %v367 = vpop.f32.mrb[0].mxu0
    %368 = vdwg.mxu0
    %v369 = vmax.f32 %v351, 0.0
    %v370 = vmax.f32 %v356, 0.0
    %v371 = vmax.f32 %v361, 0.0
    %v372 = vmax.f32 %v366, 0.0
    %v373 = vld [vmem:[#allocation7] sm:$0xff]
    %v374 = vld [vmem:[#allocation7 + $0x8] sm:$0xff]
    %v375 = vld [vmem:[#allocation7 + $0x10] sm:$0xff]
    %v376 = vld [vmem:[#allocation7 + $0x18] sm:$0xff]
    %v377 = vld [vmem:[#allocation7 + $0x20] sm:$0xff]
    %v378 = vld [vmem:[#allocation7 + $0x28] sm:$0xff]
    %v379 = vld [vmem:[#allocation7 + $0x30] sm:$0xff]
    %v380 = vld [vmem:[#allocation7 + $0x38] sm:$0xff]
    %v381 = vld [vmem:[#allocation7 + $0x40] sm:$0xff]
    %v382 = vld [vmem:[#allocation7 + $0x48] sm:$0xff]
    %v383 = vld [vmem:[#allocation7 + $0x50] sm:$0xff]
    %v384 = vld [vmem:[#allocation7 + $0x58] sm:$0xff]
    %v385 = vld [vmem:[#allocation7 + $0x60] sm:$0xff]
    %v386 = vld [vmem:[#allocation7 + $0x68] sm:$0xff]
    %v387 = vld [vmem:[#allocation7 + $0x70] sm:$0xff]
    %v388 = vld [vmem:[#allocation7 + $0x78] sm:$0xff]
    %389 = vmatprep.subr.mxu0 0.0
    %390 = vmatpush1.msra.mxu0 %v373
    %391 = vmatprep.subr.mxu0 0.0
    %392 = vmatpush1.msra.mxu0 %v374
    %393 = vmatprep.subr.mxu0 0.0
    %394 = vmatpush1.msra.mxu0 %v375
    %395 = vmatprep.subr.mxu0 0.0
    %396 = vmatpush1.msra.mxu0 %v376
    %397 = vmatprep.subr.mxu0 0.0
    %398 = vmatpush1.msra.mxu0 %v377
    %399 = vmatprep.subr.mxu0 0.0
    %400 = vmatpush1.msra.mxu0 %v378
    %401 = vmatprep.subr.mxu0 0.0
    %402 = vmatpush1.msra.mxu0 %v379
    %403 = vmatprep.subr.mxu0 0.0
    %404 = vmatpush1.msra.mxu0 %v380
    %405 = vmatprep.subr.mxu0 0.0
    %406 = vmatpush1.msra.mxu0 %v381
    %407 = vmatprep.subr.mxu0 0.0
    %408 = vmatpush1.msra.mxu0 %v382
    %409 = vmatprep.subr.mxu0 0.0
    %410 = vmatpush1.msra.mxu0 %v383
    %411 = vmatprep.subr.mxu0 0.0
    %412 = vmatpush1.msra.mxu0 %v384
    %413 = vmatprep.subr.mxu0 0.0
    %414 = vmatpush1.msra.mxu0 %v385
    %415 = vmatprep.subr.mxu0 0.0
    %416 = vmatpush1.msra.mxu0 %v386
    %417 = vmatprep.subr.mxu0 0.0
    %418 = vmatpush1.msra.mxu0 %v387
    %419 = vmatprep.subr.mxu0 0.0
    %420 = vmatpush1.msra.mxu0 %v388
    %421 = vmatprep.subr.mxu0 0.0
    %422 = vmatpush1.msra.mxu0 0.0
    %423 = vmatprep.subr.mxu0 0.0
    %424 = vmatpush1.msra.mxu0 0.0
    %425 = vmatprep.subr.mxu0 0.0
    %426 = vmatpush1.msra.mxu0 0.0
    %427 = vmatprep.subr.mxu0 0.0
    %428 = vmatpush1.msra.mxu0 0.0
    %429 = vmatprep.subr.mxu0 0.0
    %430 = vmatpush1.msra.mxu0 0.0
    %431 = vmatprep.subr.mxu0 0.0
    %432 = vmatpush1.msra.mxu0 0.0
    %433 = vmatprep.subr.mxu0 0.0
    %434 = vmatpush1.msra.mxu0 0.0
    %435 = vmatprep.subr.mxu0 0.0
    %436 = vmatpush1.msra.mxu0 0.0
    %437 = vmatprep.subr.mxu0 0.0
    %438 = vmatpush1.msra.mxu0 0.0
    %439 = vmatprep.subr.mxu0 0.0
    %440 = vmatpush1.msra.mxu0 0.0
    %441 = vmatprep.subr.mxu0 0.0
    %442 = vmatpush1.msra.mxu0 0.0
    %443 = vmatprep.subr.mxu0 0.0
    %444 = vmatpush1.msra.mxu0 0.0
    %445 = vmatprep.subr.mxu0 0.0
    %446 = vmatpush1.msra.mxu0 0.0
    %447 = vmatprep.subr.mxu0 0.0
    %448 = vmatpush1.msra.mxu0 0.0
    %449 = vmatprep.subr.mxu0 0.0
    %450 = vmatpush1.msra.mxu0 0.0
    %451 = vmatprep.subr.mxu0 0.0
    %452 = vmatpush1.msra.mxu0 0.0
    %453 = vmatprep.mubr.f32.mxu0 0.0
    %454 = vmatmul.mubr.f32.gmra.mrb[0].mxu0 %v369
    %v455 = vpop.f32.mrb[0].mxu0
    %v456 = vadd.f32 0.0, %v455
    %v457 = vpop.f32.mrb[0].mxu0
    %458 = vmatprep.mubr.f32.mxu0 0.0
    %459 = vmatmul.mubr.f32.gmra.mrb[0].mxu0 %v370
    %v460 = vpop.f32.mrb[0].mxu0
    %v461 = vadd.f32 0.0, %v460
    %v462 = vpop.f32.mrb[0].mxu0
    %463 = vmatprep.mubr.f32.mxu0 0.0
    %464 = vmatmul.mubr.f32.gmra.mrb[0].mxu0 %v371
    %v465 = vpop.f32.mrb[0].mxu0
    %v466 = vadd.f32 0.0, %v465
    %v467 = vpop.f32.mrb[0].mxu0
    %468 = vmatprep.mubr.f32.mxu0 0.0
    %469 = vmatmul.mubr.f32.gmra.mrb[0].mxu0 %v372
    %v470 = vpop.f32.mrb[0].mxu0
    %v471 = vadd.f32 0.0, %v470
    %v472 = vpop.f32.mrb[0].mxu0
    %473 = vdwg.mxu0
    %v474 = vadd.f32 %v56, %v456
    %v475 = vadd.f32 %v57, %v461
    %v476 = vadd.f32 %v58, %v466
    %v477 = vadd.f32 %v59, %v471
    %v478 = vmax.f32 %v474, 0.0
    %v479 = vmax.f32 %v475, 0.0
    %v480 = vmax.f32 %v476, 0.0
    %v481 = vmax.f32 %v477, 0.0
    %v482 = vrot.slane %v478, 7
    %v483 = vrot.slane %v479, 7
    %v484 = vrot.slane %v480, 7
    %v485 = vrot.slane %v481, 7
    %v486 = vsel %vm129, %v484, %v485
    %v487 = vsel %vm129, %v483, %v484
    %v488 = vsel %vm129, %v482, %v483
    %v489 = vsel %vm129, %v485, %v482
    %v490 = vsel %vm113, 0.0, %v489
    %v491 = vsel %vm114, 0.0, %v488
    %v492 = vsel %vm115, 0.0, %v487
    %v493 = vsel %vm116, 0.0, %v486
    %v494 = vrot.slane %v478, 1
    %v495 = vrot.slane %v479, 1
    %v496 = vrot.slane %v480, 1
    %v497 = vrot.slane %v481, 1
    %v498 = vsel %vm142, %v496, %v497
    %v499 = vsel %vm142, %v495, %v496
    %v500 = vsel %vm142, %v494, %v495
    %v501 = vsel %vm142, %v497, %v494
    %v502 = vsel %vm117, 0.0, %v500
    %v503 = vsel %vm118, 0.0, %v499
    %v504 = vsel %vm119, 0.0, %v498
    %v505 = vsel %vm120, 0.0, %v501
    %s506 = scalar_lea.vmem [#allocation5], 384
    %v507 = vld [vmem:[%s506] sm:$0xff]
    %v508 = vld [vmem:[%s506 + $0x8] sm:$0xff]
    %v509 = vld [vmem:[%s506 + $0x10] sm:$0xff]
    %v510 = vld [vmem:[%s506 + $0x18] sm:$0xff]
    %v511 = vld [vmem:[%s506 + $0x20] sm:$0xff]
    %v512 = vld [vmem:[%s506 + $0x28] sm:$0xff]
    %v513 = vld [vmem:[%s506 + $0x30] sm:$0xff]
    %v514 = vld [vmem:[%s506 + $0x38] sm:$0xff]
    %v515 = vld [vmem:[%s506 + $0x40] sm:$0xff]
    %v516 = vld [vmem:[%s506 + $0x48] sm:$0xff]
    %v517 = vld [vmem:[%s506 + $0x50] sm:$0xff]
    %v518 = vld [vmem:[%s506 + $0x58] sm:$0xff]
    %v519 = vld [vmem:[%s506 + $0x60] sm:$0xff]
    %v520 = vld [vmem:[%s506 + $0x68] sm:$0xff]
    %v521 = vld [vmem:[%s506 + $0x70] sm:$0xff]
    %v522 = vld [vmem:[%s506 + $0x78] sm:$0xff]
    %v523 = vld [vmem:[%s506 + $0x80] sm:$0xff]
    %v524 = vld [vmem:[%s506 + $0x88] sm:$0xff]
    %v525 = vld [vmem:[%s506 + $0x90] sm:$0xff]
    %v526 = vld [vmem:[%s506 + $0x98] sm:$0xff]
    %v527 = vld [vmem:[%s506 + $0xa0] sm:$0xff]
    %v528 = vld [vmem:[%s506 + $0xa8] sm:$0xff]
    %v529 = vld [vmem:[%s506 + $0xb0] sm:$0xff]
    %v530 = vld [vmem:[%s506 + $0xb8] sm:$0xff]
    %v531 = vld [vmem:[%s506 + $0xc0] sm:$0xff]
    %v532 = vld [vmem:[%s506 + $0xc8] sm:$0xff]
    %v533 = vld [vmem:[%s506 + $0xd0] sm:$0xff]
    %v534 = vld [vmem:[%s506 + $0xd8] sm:$0xff]
    %v535 = vld [vmem:[%s506 + $0xe0] sm:$0xff]
    %v536 = vld [vmem:[%s506 + $0xe8] sm:$0xff]
    %v537 = vld [vmem:[%s506 + $0xf0] sm:$0xff]
    %v538 = vld [vmem:[%s506 + $0xf8] sm:$0xff]
    %v539 = vld [vmem:[%s506 + $0x100] sm:$0xff]
    %v540 = vld [vmem:[%s506 + $0x108] sm:$0xff]
    %v541 = vld [vmem:[%s506 + $0x110] sm:$0xff]
    %v542 = vld [vmem:[%s506 + $0x118] sm:$0xff]
    %v543 = vld [vmem:[%s506 + $0x120] sm:$0xff]
    %v544 = vld [vmem:[%s506 + $0x128] sm:$0xff]
    %v545 = vld [vmem:[%s506 + $0x130] sm:$0xff]
    %v546 = vld [vmem:[%s506 + $0x138] sm:$0xff]
    %v547 = vld [vmem:[%s506 + $0x140] sm:$0xff]
    %v548 = vld [vmem:[%s506 + $0x148] sm:$0xff]
    %v549 = vld [vmem:[%s506 + $0x150] sm:$0xff]
    %v550 = vld [vmem:[%s506 + $0x158] sm:$0xff]
    %v551 = vld [vmem:[%s506 + $0x160] sm:$0xff]
    %v552 = vld [vmem:[%s506 + $0x168] sm:$0xff]
    %v553 = vld [vmem:[%s506 + $0x170] sm:$0xff]
    %v554 = vld [vmem:[%s506 + $0x178] sm:$0xff]
    %555 = vmatprep.subr.mxu0 0.0
    %556 = vmatpush1.msra.mxu0 %v507
    %557 = vmatprep.subr.mxu0 0.0
    %558 = vmatpush1.msra.mxu0 %v508
    %559 = vmatprep.subr.mxu0 0.0
    %560 = vmatpush1.msra.mxu0 %v509
    %561 = vmatprep.subr.mxu0 0.0
    %562 = vmatpush1.msra.mxu0 %v510
    %563 = vmatprep.subr.mxu0 0.0
    %564 = vmatpush1.msra.mxu0 %v511
    %565 = vmatprep.subr.mxu0 0.0
    %566 = vmatpush1.msra.mxu0 %v512
    %567 = vmatprep.subr.mxu0 0.0
    %568 = vmatpush1.msra.mxu0 %v513
    %569 = vmatprep.subr.mxu0 0.0
    %570 = vmatpush1.msra.mxu0 %v514
    %571 = vmatprep.subr.mxu0 0.0
    %572 = vmatpush1.msra.mxu0 %v515
    %573 = vmatprep.subr.mxu0 0.0
    %574 = vmatpush1.msra.mxu0 %v516
    %575 = vmatprep.subr.mxu0 0.0
    %576 = vmatpush1.msra.mxu0 %v517
    %577 = vmatprep.subr.mxu0 0.0
    %578 = vmatpush1.msra.mxu0 %v518
    %579 = vmatprep.subr.mxu0 0.0
    %580 = vmatpush1.msra.mxu0 %v519
    %581 = vmatprep.subr.mxu0 0.0
    %582 = vmatpush1.msra.mxu0 %v520
    %583 = vmatprep.subr.mxu0 0.0
    %584 = vmatpush1.msra.mxu0 %v521
    %585 = vmatprep.subr.mxu0 0.0
    %586 = vmatpush1.msra.mxu0 %v522
    %587 = vmatprep.subr.mxu0 0.0
    %588 = vmatpush1.msra.mxu0 %v523
    %589 = vmatprep.subr.mxu0 0.0
    %590 = vmatpush1.msra.mxu0 %v524
    %591 = vmatprep.subr.mxu0 0.0
    %592 = vmatpush1.msra.mxu0 %v525
    %593 = vmatprep.subr.mxu0 0.0
    %594 = vmatpush1.msra.mxu0 %v526
    %595 = vmatprep.subr.mxu0 0.0
    %596 = vmatpush1.msra.mxu0 %v527
    %597 = vmatprep.subr.mxu0 0.0
    %598 = vmatpush1.msra.mxu0 %v528
    %599 = vmatprep.subr.mxu0 0.0
    %600 = vmatpush1.msra.mxu0 %v529
    %601 = vmatprep.subr.mxu0 0.0
    %602 = vmatpush1.msra.mxu0 %v530
    %603 = vmatprep.subr.mxu0 0.0
    %604 = vmatpush1.msra.mxu0 %v531
    %605 = vmatprep.subr.mxu0 0.0
    %606 = vmatpush1.msra.mxu0 %v532
    %607 = vmatprep.subr.mxu0 0.0
    %608 = vmatpush1.msra.mxu0 %v533
    %609 = vmatprep.subr.mxu0 0.0
    %610 = vmatpush1.msra.mxu0 %v534
    %611 = vmatprep.subr.mxu0 0.0
    %612 = vmatpush1.msra.mxu0 %v535
    %613 = vmatprep.subr.mxu0 0.0
    %614 = vmatpush1.msra.mxu0 %v536
    %615 = vmatprep.subr.mxu0 0.0
    %616 = vmatpush1.msra.mxu0 %v537
    %617 = vmatprep.subr.mxu0 0.0
    %618 = vmatpush1.msra.mxu0 %v538
    %619 = vmatprep.mubr.f32.mxu0 %v478
    %620 = vmatmul.mubr.f32.gmra.mrb[0].mxu0 %v490
    %v621 = vpop.f32.mrb[0].mxu0
    %v622 = vadd.f32 0.0, %v621
    %v623 = vpop.f32.mrb[0].mxu0
    %624 = vmatprep.mubr.f32.mxu0 %v479
    %625 = vmatmul.mubr.f32.gmra.mrb[0].mxu0 %v491
    %v626 = vpop.f32.mrb[0].mxu0
    %v627 = vadd.f32 0.0, %v626
    %v628 = vpop.f32.mrb[0].mxu0
    %629 = vmatprep.mubr.f32.mxu0 %v480
    %630 = vmatmul.mubr.f32.gmra.mrb[0].mxu0 %v492
    %v631 = vpop.f32.mrb[0].mxu0
    %v632 = vadd.f32 0.0, %v631
    %v633 = vpop.f32.mrb[0].mxu0
    %634 = vmatprep.mubr.f32.mxu0 %v481
    %635 = vmatmul.mubr.f32.gmra.mrb[0].mxu0 %v493
    %v636 = vpop.f32.mrb[0].mxu0
    %v637 = vadd.f32 0.0, %v636
    %v638 = vpop.f32.mrb[0].mxu0
    %639 = vdwg.mxu0
    %640 = vmatprep.subr.mxu0 0.0
    %641 = vmatpush1.msra.mxu0 %v539
    %642 = vmatprep.subr.mxu0 0.0
    %643 = vmatpush1.msra.mxu0 %v540
    %644 = vmatprep.subr.mxu0 0.0
    %645 = vmatpush1.msra.mxu0 %v541
    %646 = vmatprep.subr.mxu0 0.0
    %647 = vmatpush1.msra.mxu0 %v542
    %648 = vmatprep.subr.mxu0 0.0
    %649 = vmatpush1.msra.mxu0 %v543
    %650 = vmatprep.subr.mxu0 0.0
    %651 = vmatpush1.msra.mxu0 %v544
    %652 = vmatprep.subr.mxu0 0.0
    %653 = vmatpush1.msra.mxu0 %v545
    %654 = vmatprep.subr.mxu0 0.0
    %655 = vmatpush1.msra.mxu0 %v546
    %656 = vmatprep.subr.mxu0 0.0
    %657 = vmatpush1.msra.mxu0 %v547
    %658 = vmatprep.subr.mxu0 0.0
    %659 = vmatpush1.msra.mxu0 %v548
    %660 = vmatprep.subr.mxu0 0.0
    %661 = vmatpush1.msra.mxu0 %v549
    %662 = vmatprep.subr.mxu0 0.0
    %663 = vmatpush1.msra.mxu0 %v550
    %664 = vmatprep.subr.mxu0 0.0
    %665 = vmatpush1.msra.mxu0 %v551
    %666 = vmatprep.subr.mxu0 0.0
    %667 = vmatpush1.msra.mxu0 %v552
    %668 = vmatprep.subr.mxu0 0.0
    %669 = vmatpush1.msra.mxu0 %v553
    %670 = vmatprep.subr.mxu0 0.0
    %671 = vmatpush1.msra.mxu0 %v554
    %672 = vmatprep.subr.mxu0 0.0
    %673 = vmatpush1.msra.mxu0 0.0
    %674 = vmatprep.subr.mxu0 0.0
    %675 = vmatpush1.msra.mxu0 0.0
    %676 = vmatprep.subr.mxu0 0.0
    %677 = vmatpush1.msra.mxu0 0.0
    %678 = vmatprep.subr.mxu0 0.0
    %679 = vmatpush1.msra.mxu0 0.0
    %680 = vmatprep.subr.mxu0 0.0
    %681 = vmatpush1.msra.mxu0 0.0
    %682 = vmatprep.subr.mxu0 0.0
    %683 = vmatpush1.msra.mxu0 0.0
    %684 = vmatprep.subr.mxu0 0.0
    %685 = vmatpush1.msra.mxu0 0.0
    %686 = vmatprep.subr.mxu0 0.0
    %687 = vmatpush1.msra.mxu0 0.0
    %688 = vmatprep.subr.mxu0 0.0
    %689 = vmatpush1.msra.mxu0 0.0
    %690 = vmatprep.subr.mxu0 0.0
    %691 = vmatpush1.msra.mxu0 0.0
    %692 = vmatprep.subr.mxu0 0.0
    %693 = vmatpush1.msra.mxu0 0.0
    %694 = vmatprep.subr.mxu0 0.0
    %695 = vmatpush1.msra.mxu0 0.0
    %696 = vmatprep.subr.mxu0 0.0
    %697 = vmatpush1.msra.mxu0 0.0
    %698 = vmatprep.subr.mxu0 0.0
    %699 = vmatpush1.msra.mxu0 0.0
    %700 = vmatprep.subr.mxu0 0.0
    %701 = vmatpush1.msra.mxu0 0.0
    %702 = vmatprep.subr.mxu0 0.0
    %703 = vmatpush1.msra.mxu0 0.0
    %704 = vmatprep.mubr.f32.mxu0 0.0
    %705 = vmatmul.mubr.f32.gmra.mrb[0].mxu0 %v502
    %v706 = vpop.f32.mrb[0].mxu0
    %v707 = vadd.f32 %v622, %v706
    %v708 = vpop.f32.mrb[0].mxu0
    %709 = vmatprep.mubr.f32.mxu0 0.0
    %710 = vmatmul.mubr.f32.gmra.mrb[0].mxu0 %v503
    %v711 = vpop.f32.mrb[0].mxu0
    %v712 = vadd.f32 %v627, %v711
    %v713 = vpop.f32.mrb[0].mxu0
    %714 = vmatprep.mubr.f32.mxu0 0.0
    %715 = vmatmul.mubr.f32.gmra.mrb[0].mxu0 %v504
    %v716 = vpop.f32.mrb[0].mxu0
    %v717 = vadd.f32 %v632, %v716
    %v718 = vpop.f32.mrb[0].mxu0
    %719 = vmatprep.mubr.f32.mxu0 0.0
    %720 = vmatmul.mubr.f32.gmra.mrb[0].mxu0 %v505
    %v721 = vpop.f32.mrb[0].mxu0
    %v722 = vadd.f32 %v637, %v721
    %v723 = vpop.f32.mrb[0].mxu0
    %724 = vdwg.mxu0
    %v725 = vmax.f32 %v707, 0.0
    %v726 = vmax.f32 %v712, 0.0
    %v727 = vmax.f32 %v717, 0.0
    %v728 = vmax.f32 %v722, 0.0
    %s729 = scalar_lea.vmem [#allocation7], 128
    %v730 = vld [vmem:[%s729] sm:$0xff]
    %v731 = vld [vmem:[%s729 + $0x8] sm:$0xff]
    %v732 = vld [vmem:[%s729 + $0x10] sm:$0xff]
    %v733 = vld [vmem:[%s729 + $0x18] sm:$0xff]
    %v734 = vld [vmem:[%s729 + $0x20] sm:$0xff]
    %v735 = vld [vmem:[%s729 + $0x28] sm:$0xff]
    %v736 = vld [vmem:[%s729 + $0x30] sm:$0xff]
    %v737 = vld [vmem:[%s729 + $0x38] sm:$0xff]
    %v738 = vld [vmem:[%s729 + $0x40] sm:$0xff]
    %v739 = vld [vmem:[%s729 + $0x48] sm:$0xff]
    %v740 = vld [vmem:[%s729 + $0x50] sm:$0xff]
    %v741 = vld [vmem:[%s729 + $0x58] sm:$0xff]
    %v742 = vld [vmem:[%s729 + $0x60] sm:$0xff]
    %v743 = vld [vmem:[%s729 + $0x68] sm:$0xff]
    %v744 = vld [vmem:[%s729 + $0x70] sm:$0xff]
    %v745 = vld [vmem:[%s729 + $0x78] sm:$0xff]
    %746 = vmatprep.subr.mxu0 0.0
    %747 = vmatpush1.msra.mxu0 %v730
    %748 = vmatprep.subr.mxu0 0.0
    %749 = vmatpush1.msra.mxu0 %v731
    %750 = vmatprep.subr.mxu0 0.0
    %751 = vmatpush1.msra.mxu0 %v732
    %752 = vmatprep.subr.mxu0 0.0
    %753 = vmatpush1.msra.mxu0 %v733
    %754 = vmatprep.subr.mxu0 0.0
    %755 = vmatpush1.msra.mxu0 %v734
    %756 = vmatprep.subr.mxu0 0.0
    %757 = vmatpush1.msra.mxu0 %v735
    %758 = vmatprep.subr.mxu0 0.0
    %759 = vmatpush1.msra.mxu0 %v736
    %760 = vmatprep.subr.mxu0 0.0
    %761 = vmatpush1.msra.mxu0 %v737
    %762 = vmatprep.subr.mxu0 0.0
    %763 = vmatpush1.msra.mxu0 %v738
    %764 = vmatprep.subr.mxu0 0.0
    %765 = vmatpush1.msra.mxu0 %v739
    %766 = vmatprep.subr.mxu0 0.0
    %767 = vmatpush1.msra.mxu0 %v740
    %768 = vmatprep.subr.mxu0 0.0
    %769 = vmatpush1.msra.mxu0 %v741
    %770 = vmatprep.subr.mxu0 0.0
    %771 = vmatpush1.msra.mxu0 %v742
    %772 = vmatprep.subr.mxu0 0.0
    %773 = vmatpush1.msra.mxu0 %v743
    %774 = vmatprep.subr.mxu0 0.0
    %775 = vmatpush1.msra.mxu0 %v744
    %776 = vmatprep.subr.mxu0 0.0
    %777 = vmatpush1.msra.mxu0 %v745
    %778 = vmatprep.subr.mxu0 0.0
    %779 = vmatpush1.msra.mxu0 0.0
    %780 = vmatprep.subr.mxu0 0.0
    %781 = vmatpush1.msra.mxu0 0.0
    %782 = vmatprep.subr.mxu0 0.0
    %783 = vmatpush1.msra.mxu0 0.0
    %784 = vmatprep.subr.mxu0 0.0
    %785 = vmatpush1.msra.mxu0 0.0
    %786 = vmatprep.subr.mxu0 0.0
    %787 = vmatpush1.msra.mxu0 0.0
    %788 = vmatprep.subr.mxu0 0.0
    %789 = vmatpush1.msra.mxu0 0.0
    %790 = vmatprep.subr.mxu0 0.0
    %791 = vmatpush1.msra.mxu0 0.0
    %792 = vmatprep.subr.mxu0 0.0
    %793 = vmatpush1.msra.mxu0 0.0
    %794 = vmatprep.subr.mxu0 0.0
    %795 = vmatpush1.msra.mxu0 0.0
    %796 = vmatprep.subr.mxu0 0.0
    %797 = vmatpush1.msra.mxu0 0.0
    %798 = vmatprep.subr.mxu0 0.0
    %799 = vmatpush1.msra.mxu0 0.0
    %800 = vmatprep.subr.mxu0 0.0
    %801 = vmatpush1.msra.mxu0 0.0
    %802 = vmatprep.subr.mxu0 0.0
    %803 = vmatpush1.msra.mxu0 0.0
    %804 = vmatprep.subr.mxu0 0.0
    %805 = vmatpush1.msra.mxu0 0.0
    %806 = vmatprep.subr.mxu0 0.0
    %807 = vmatpush1.msra.mxu0 0.0
    %808 = vmatprep.subr.mxu0 0.0
    %809 = vmatpush1.msra.mxu0 0.0
    %810 = vmatprep.mubr.f32.mxu0 0.0
    %811 = vmatmul.mubr.f32.gmra.mrb[0].mxu0 %v725
    %v812 = vpop.f32.mrb[0].mxu0
    %v813 = vadd.f32 0.0, %v812
    %v814 = vpop.f32.mrb[0].mxu0
    %815 = vmatprep.mubr.f32.mxu0 0.0
    %816 = vmatmul.mubr.f32.gmra.mrb[0].mxu0 %v726
    %v817 = vpop.f32.mrb[0].mxu0
    %v818 = vadd.f32 0.0, %v817
    %v819 = vpop.f32.mrb[0].mxu0
    %820 = vmatprep.mubr.f32.mxu0 0.0
    %821 = vmatmul.mubr.f32.gmra.mrb[0].mxu0 %v727
    %v822 = vpop.f32.mrb[0].mxu0
    %v823 = vadd.f32 0.0, %v822
    %v824 = vpop.f32.mrb[0].mxu0
    %825 = vmatprep.mubr.f32.mxu0 0.0
    %826 = vmatmul.mubr.f32.gmra.mrb[0].mxu0 %v728
    %v827 = vpop.f32.mrb[0].mxu0
    %v828 = vadd.f32 0.0, %v827
    %v829 = vpop.f32.mrb[0].mxu0
    %830 = vdwg.mxu0
    %v831 = vadd.f32 %v474, %v813
    %v832 = vadd.f32 %v475, %v818
    %v833 = vadd.f32 %v476, %v823
    %v834 = vadd.f32 %v477, %v828
    %v835 = vmax.f32 %v831, 0.0
    %v836 = vmax.f32 %v832, 0.0
    %v837 = vmax.f32 %v833, 0.0
    %v838 = vmax.f32 %v834, 0.0
    %839 = vst [vmem:[#allocation8] sm:$0xff] %v835
    %840 = vst [vmem:[#allocation8 + $0x8] sm:$0xff] %v836
    %841 = vst [vmem:[#allocation8 + $0x10] sm:$0xff] %v837
    %842 = vst [vmem:[#allocation8 + $0x18] sm:$0xff] %v838
    // Predicated region
    $region26: #{tpu_custom_call.1} parent=1 // pred_check
      _
    $region27: #{tpu_custom_call.1} parent=1 // pred_check_branch
      %844 = sbr.rel (0) target = $region29
    $region28: #{tpu_custom_call.1} parent=1 // pred_region
      %s846 = ssub.s32 512, 512
      %847 = vsyncadd [#allocation4], %s846
      %s848 = sshll.u32 [#allocation8], 4
      %s849 = int_to_ptr.vmem [resolvable:$true] %s848
      %854 = dma.vmem_to_hbm [thread:$0]  %s849, 512, %s3, [#allocation4], 128, 128, 8
    $region29: #{tpu_custom_call.1} parent=1 // pred_fallthru
      _
    // Predicated region
    $region30: #{tpu_custom_call.1} parent=1 // pred_check
      _
    $region31: #{tpu_custom_call.1} parent=1 // pred_check_branch
      %856 = sbr.rel (0) target = $region33
    $region32: #{tpu_custom_call.1} parent=1 // pred_region
      %857 = dma.done [#allocation4], 512
    $region33: #{tpu_custom_call.1} parent=1 // pred_fallthru
      _
    %858 = vsyncpa [#allocation3], 1
    %859 = vsyncpa [#allocation6], 1
    %860 = vsyncpa [#allocation4], 1

</llo_original>
